<compile_context>
chip_gen: v7x
topology: tpu7x:2x2x1
jax: 0.10.0
libtpu: 0.0.40
codegen_flags: <defaults>
</compile_context>

<pallas_src>
import jax
import jax.numpy as jnp
from jax.experimental import pallas as pl
from jax.experimental.pallas import tpu as pltpu


def _round_up(x, m):
    return ((x + m - 1) // m) * m


def _cdiv(a, b):
    return (a + b - 1) // b


def _vmem_capacity_bytes():
    """Per-core VMEM capacity; conservative 64 MiB (v7x) if the query fails."""
    try:
        return int(pltpu.get_tpu_info().vmem_capacity_bytes)
    except Exception:
        return 64 * 1024 * 1024


# Cache: does this JAX build accept pipeline_mode=pl.Buffered(1)?
_BUFFERED1_OK = None


# ----------------------------- kernels ---------------------------------------

def _ffn_swiglu_resident_kernel(x_ref, w12_ref, b12_ref, w3_ref, b3_ref, o_ref):
    """Single hidden tile (weights VMEM-resident). grid = (M tiles,)."""
    x = x_ref[...].astype(w12_ref.dtype)          # in-kernel cast (no wrapper cast)
    h12 = jnp.dot(x, w12_ref[...], preferred_element_type=jnp.float32) + b12_ref[...]
    th = h12.shape[-1] // 2                        # th is a multiple of 128
    h_lin = h12[:, :th]
    h_act = h12[:, th:]
    h = h_lin * (h_act * jax.nn.sigmoid(h_act))    # SiLU gating in f32
    o_ref[...] = (jnp.dot(h.astype(w3_ref.dtype), w3_ref[...],
                          preferred_element_type=jnp.float32)
                  + b3_ref[...]).astype(o_ref.dtype)


def _ffn_swiglu_tiled_kernel(x_ref, w12_ref, b12_ref, w3_ref, b3_ref, o_ref, acc_ref):
    """Streamed hidden tiles. grid = (M tiles [parallel], hidden tiles [arbitrary])."""
    k = pl.program_id(1)

    @pl.when(k == 0)
    def _init():
        acc_ref[...] = jnp.zeros_like(acc_ref)

    x = x_ref[...].astype(w12_ref.dtype)
    h12 = jnp.dot(x, w12_ref[...], preferred_element_type=jnp.float32) + b12_ref[...]
    th = h12.shape[-1] // 2
    h_lin = h12[:, :th]
    h_act = h12[:, th:]
    h = h_lin * (h_act * jax.nn.sigmoid(h_act))
    acc_ref[...] += jnp.dot(h.astype(w3_ref.dtype), w3_ref[...],
                            preferred_element_type=jnp.float32)

    @pl.when(k == pl.num_programs(1) - 1)
    def _finalize():
        o_ref[...] = (acc_ref[...] + b3_ref[...]).astype(o_ref.dtype)


# --------------------------- weight preparation -------------------------------

def prepare_ffn_params(w_fc, b_fc, w_act, b_act, w_out, b_out, *,
                       tile_h=None, param_dtype=None, weight_vmem_fraction=0.5):
    """One-time weight preparation (call once at init, NOT per forward).

    Inputs use PyTorch Linear convention: w_fc, w_act: (hidden, dim);
    w_out: (dim, hidden); biases 1-D.  The two gate projections are fused and
    interleaved per hidden tile of size `th` (a multiple of 128).
    """
    hidden, dim = w_fc.shape
    if param_dtype is None:
        param_dtype = w_fc.dtype
    wsz = jnp.dtype(param_dtype).itemsize

    if tile_h is None:
        # Weights fully VMEM-resident (single hidden tile) when they fit in a
        # fraction of this generation's VMEM; otherwise stream 512-wide slabs.
        resident_bytes = 3 * dim * _round_up(hidden, 128) * wsz
        if resident_bytes <= int(weight_vmem_fraction * _vmem_capacity_bytes()):
            tile_h = _round_up(hidden, 128)
        else:
            tile_h = 512
    assert tile_h % 128 == 0, "tile_h must be a multiple of 128 (lane alignment)"

    if hidden <= tile_h:
        th = _round_up(hidden, 128)       # 128-aligned even in single-tile path
        hidden_pad = th
    else:
        th = tile_h
        hidden_pad = _round_up(hidden, th)
    n_h = hidden_pad // th

    def pad_h(a, axis):
        pad = hidden_pad - hidden
        if pad == 0:
            return a
        widths = [(0, 0)] * a.ndim
        widths[axis] = (0, pad)
        return jnp.pad(a, widths)

    w1 = pad_h(w_fc.T, 1).astype(param_dtype)    # (dim, hidden_pad)
    w2 = pad_h(w_act.T, 1).astype(param_dtype)   # (dim, hidden_pad)
    w3 = pad_h(w_out.T, 0).astype(param_dtype)   # (hidden_pad, dim)
    b1 = pad_h(b_fc, 0).astype(jnp.float32)
    b2 = pad_h(b_act, 0).astype(jnp.float32)

    # Fuse + interleave per hidden tile: columns [w1 tile k | w2 tile k]
    w12 = jnp.concatenate(
        [w1.reshape(dim, n_h, th), w2.reshape(dim, n_h, th)], axis=-1
    ).reshape(dim, 2 * hidden_pad)
    b12 = jnp.concatenate(
        [b1.reshape(n_h, th), b2.reshape(n_h, th)], axis=-1
    ).reshape(1, 2 * hidden_pad)
    b3 = b_out.astype(jnp.float32).reshape(1, dim)

    return dict(w12=w12, b12=b12, w3=w3, b3=b3,
                dim=dim, hidden=hidden, hidden_pad=hidden_pad, th=th, n_h=n_h)


# ------------------------------- forward --------------------------------------

def ffn_swiglu(x, params, *, tile_m=512):
    """x: (batch, seq, dim); params from prepare_ffn_params."""
    global _BUFFERED1_OK
    batch, seq, dim = x.shape
    assert dim == params["dim"]
    th, n_h, hidden_pad = params["th"], params["n_h"], params["hidden_pad"]
    w12, b12, w3, b3 = params["w12"], params["b12"], params["w3"], params["b3"]
    compute_dtype = w12.dtype
    out_dtype = x.dtype
    xsz = jnp.dtype(x.dtype).itemsize
    wsz = jnp.dtype(compute_dtype).itemsize
    osz = jnp.dtype(out_dtype).itemsize

    M = batch * seq
    # bf16 packs 2 rows per sublane -> 16-row alignment; f32 -> 8.
    align = 16 if min(xsz, wsz) < 4 else 8
    tm = min(tile_m, _round_up(M, align))
    # Guarantee >= 2 M tiles so the "parallel" axis shards over v7x's 2 TCs.
    if _cdiv(M, tm) == 1 and tm >= 256:
        tm = _round_up(_cdiv(M, 2), align)
    M_pad = _round_up(M, tm)
    n_m = M_pad // tm

    x2 = x.reshape(M, dim)                 # NOTE: no wrapper-side dtype cast
    if M_pad != M:
        x2 = jnp.pad(x2, ((0, M_pad - M), (0, 0)))

    # --- VMEM budget (includes h12 / h / cast intermediates) -----------------
    x_blk, o_blk = tm * dim * xsz, tm * dim * osz
    w12_blk, w3_blk = dim * 2 * th * wsz, th * dim * wsz
    b12_blk, b3_blk = 2 * th * 4, dim * 4
    interm = tm * 2 * th * 4 + tm * th * 4 + tm * dim * wsz
    if n_h == 1:
        vmem_needed = (2 * (x_blk + o_blk)                        # pipelined x / out
                       + (w12_blk + b12_blk + w3_blk + b3_blk)    # resident weights
                       + interm)
        weight_passes = 1
    else:
        vmem_needed = (2 * (x_blk + w12_blk + b12_blk + w3_blk + b3_blk + o_blk)
                       + tm * dim * 4 + interm)                   # + f32 accumulator
        weight_passes = n_m
    vmem_cap = _vmem_capacity_bytes()
    vmem_limit = int(min(max(vmem_needed + (4 << 20), 32 << 20), (vmem_cap * 7) // 8))

    cost = pl.CostEstimate(
        flops=int(6 * M_pad * dim * hidden_pad),
        transcendentals=int(M_pad * hidden_pad),
        bytes_accessed=int(M_pad * dim * (xsz + osz)
                           + (w12.size + w3.size) * wsz * weight_passes
                           + (b12.size + b3.size) * 4),
    )

    if n_h == 1:
        compiler_params = pltpu.CompilerParams(
            dimension_semantics=("parallel",), vmem_limit_bytes=vmem_limit)

        def make_call(weight_mode):
            def wspec(shape):
                return pl.BlockSpec(shape, lambda i: (0, 0), pipeline_mode=weight_mode)
            return pl.pallas_call(
                _ffn_swiglu_resident_kernel,
                out_shape=jax.ShapeDtypeStruct((M_pad, dim), out_dtype),
                grid_spec=pltpu.PrefetchScalarGridSpec(
                    num_scalar_prefetch=0,
                    grid=(n_m,),
                    in_specs=[
                        pl.BlockSpec((tm, dim), lambda i: (i, 0)),   # x rows
                        wspec((dim, 2 * th)),                        # fused w12
                        wspec((1, 2 * th)),                          # fused bias
                        wspec((th, dim)),                            # w3
                        wspec((1, dim)),                             # b3
                    ],
                    out_specs=pl.BlockSpec((tm, dim), lambda i: (i, 0)),
                ),
                compiler_params=compiler_params,
                cost_estimate=cost,
            )

        out2 = None
        if _BUFFERED1_OK is not False:
            try:
                out2 = make_call(pl.Buffered(1))(x2, w12, b12, w3, b3)
                _BUFFERED1_OK = True
            except Exception:
                _BUFFERED1_OK = False
        if out2 is None:
            out2 = make_call(None)(x2, w12, b12, w3, b3)
    else:
        def h_idx(i, k):
            # Serpentine hidden order: even M tiles sweep 0..n_h-1, odd sweep
            # n_h-1..0, so the weight tile at each M-tile boundary is reused.
            return k + (i % 2) * (n_h - 1 - 2 * k)

        out2 = pl.pallas_call(
            _ffn_swiglu_tiled_kernel,
            out_shape=jax.ShapeDtypeStruct((M_pad, dim), out_dtype),
            grid_spec=pltpu.PrefetchScalarGridSpec(
                num_scalar_prefetch=0,
                grid=(n_m, n_h),
                in_specs=[
                    pl.BlockSpec((tm, dim), lambda i, k: (i, 0)),              # x
                    pl.BlockSpec((dim, 2 * th), lambda i, k: (0, h_idx(i, k))),  # w12
                    pl.BlockSpec((1, 2 * th), lambda i, k: (0, h_idx(i, k))),    # b12
                    pl.BlockSpec((th, dim), lambda i, k: (h_idx(i, k), 0)),      # w3
                    pl.BlockSpec((1, dim), lambda i, k: (0, 0)),                 # b3
                ],
                out_specs=pl.BlockSpec((tm, dim), lambda i, k: (i, 0)),
                scratch_shapes=[pltpu.VMEM((tm, dim), jnp.float32)],
            ),
            compiler_params=pltpu.CompilerParams(
                dimension_semantics=("parallel", "arbitrary"),
                vmem_limit_bytes=vmem_limit,
            ),
            cost_estimate=cost,
        )(x2, w12, b12, w3, b3)

    if M_pad != M:
        out2 = out2[:M]
    return out2.reshape(batch, seq, dim)


# ------------------------------ reference / tests -----------------------------

def _reference(x, w_fc, b_fc, w_act, b_act, w_out, b_out):
    xf = x.astype(jnp.float32)
    h_lin = jnp.einsum("bsd,hd->bsh", xf, w_fc.astype(jnp.float32)) + b_fc
    h_act = jnp.einsum("bsd,hd->bsh", xf, w_act.astype(jnp.float32)) + b_act
    h = h_lin * (h_act * jax.nn.sigmoid(h_act))
    return jnp.einsum("bsh,dh->bsd", h, w_out.astype(jnp.float32)) + b_out


def _make_weights(key, dim, hidden):
    k1, k2, k3, k4, k5, k6 = jax.random.split(key, 6)
    w_fc = jax.random.normal(k1, (hidden, dim), jnp.float32) * 0.05
    b_fc = jax.random.normal(k2, (hidden,), jnp.float32) * 0.05
    w_act = jax.random.normal(k3, (hidden, dim), jnp.float32) * 0.05
    b_act = jax.random.normal(k4, (hidden,), jnp.float32) * 0.05
    w_out = jax.random.normal(k5, (dim, hidden), jnp.float32) * 0.05
    b_out = jax.random.normal(k6, (dim,), jnp.float32) * 0.05
    return w_fc, b_fc, w_act, b_act, w_out, b_out


# TODO(synk): the SConv recurrence (cumsum scan / GroupNorm / embedding /
# RMSNorm / token_out) of SConvMH is not part of this kernel; only FFNSwiGLU is
# lowered to Pallas.
if __name__ == "__main__":
    key = jax.random.PRNGKey(0)
    kw1, kx1, kw2, kx2 = jax.random.split(key, 4)

    # --- test 1: tiny shapes, auto weights-resident path, f32 ----------------
    batch, seq, dim, hidden = 2, 8, 32, 64
    x = jax.random.normal(kx1, (batch, seq, dim), dtype=jnp.float32)
    weights = _make_weights(kw1, dim, hidden)
    params = prepare_ffn_params(*weights)               # one-time weight prep
    y = jax.block_until_ready(ffn_swiglu(x, params))
    y_ref = _reference(x, *weights)
    assert y.shape == (batch, seq, dim)
    assert jnp.allclose(y, y_ref, atol=1e-4, rtol=1e-4), "f32 resident mismatch"

    # --- test 2: forced hidden tiling + ragged M (serpentine streaming) ------
    batch2, seq2, dim2, hidden2 = 2, 37, 128, 320       # M=74, 3 hidden tiles
    x2 = jax.random.normal(kx2, (batch2, seq2, dim2), dtype=jnp.float32)
    weights2 = _make_weights(kw2, dim2, hidden2)
    params2 = prepare_ffn_params(*weights2, tile_h=128)
    y2 = jax.block_until_ready(ffn_swiglu(x2, params2, tile_m=32))
    y2_ref = _reference(x2, *weights2)
    assert y2.shape == (batch2, seq2, dim2)
    assert jnp.allclose(y2, y2_ref, atol=1e-3, rtol=1e-3), "f32 tiled mismatch"

    # --- test 3: bf16 weights on the streaming path (f32 accumulation) -------
    params2_bf16 = prepare_ffn_params(*weights2, tile_h=128,
                                      param_dtype=jnp.bfloat16)
    y3 = jax.block_until_ready(ffn_swiglu(x2, params2_bf16, tile_m=32))
    assert y3.shape == (batch2, seq2, dim2)
    assert jnp.allclose(y3, y2_ref, atol=5e-2, rtol=5e-2), "bf16 tiled mismatch"

    # --- test 4: auto weights-resident path, default tile_m ------------------
    params2_auto = prepare_ffn_params(*weights2)
    y4 = jax.block_until_ready(ffn_swiglu(x2, params2_auto))
    assert jnp.allclose(y4, y2_ref, atol=1e-3, rtol=1e-3), "f32 auto-resident mismatch"

    print("KERNEL_OK")
</pallas_src>

<mosaic_0001>
module attributes {stable_mosaic.version = 11 : i64} {
  func.func @_ffn_swiglu_resident_kernel(%arg0: i32, %arg1: memref<16x32xf32, #tpu.memory_space<vmem>>, %arg2: memref<32x256xf32, #tpu.memory_space<vmem>>, %arg3: memref<1x256xf32, #tpu.memory_space<vmem>>, %arg4: memref<128x32xf32, #tpu.memory_space<vmem>>, %arg5: memref<1x32xf32, #tpu.memory_space<vmem>>, %arg6: memref<16x32xf32, #tpu.memory_space<vmem>>) attributes {dimension_semantics = [#tpu.dimension_semantics<parallel>], iteration_bounds = array<i64: 1>, scalar_prefetch = 0 : i64, scratch_operands = 0 : i64, tpu.core_type = #tpu.core_type<tc>, window_params = [{transform_indices = @transform_0, window_bounds = array<i64: 16, 32>}, {pipeline_mode = #tpu.pipeline_mode<synchronous>, transform_indices = @transform_1, window_bounds = array<i64: 32, 256>}, {pipeline_mode = #tpu.pipeline_mode<synchronous>, transform_indices = @transform_2, window_bounds = array<i64: 1, 256>}, {pipeline_mode = #tpu.pipeline_mode<synchronous>, transform_indices = @transform_3, window_bounds = array<i64: 128, 32>}, {pipeline_mode = #tpu.pipeline_mode<synchronous>, transform_indices = @transform_4, window_bounds = array<i64: 1, 32>}, {transform_indices = @transform_5, window_bounds = array<i64: 16, 32>}]} {
    %c0 = arith.constant 0 : index
    %c0_0 = arith.constant 0 : index
    %0 = vector.load %arg1[%c0, %c0_0] : memref<16x32xf32, #tpu.memory_space<vmem>>, vector<16x32xf32>
    %c0_1 = arith.constant 0 : index
    %c0_2 = arith.constant 0 : index
    %1 = vector.load %arg2[%c0_1, %c0_2] : memref<32x256xf32, #tpu.memory_space<vmem>>, vector<32x256xf32>
    %cst = arith.constant dense<0.000000e+00> : vector<16x256xf32>
    %2 = tpu.matmul %0, %1, %cst {dimension_numbers = #tpu.dot_dimension_numbers<[1], [0], [0], [1], [0, 0, 1, 1], [], []>} : vector<16x32xf32>, vector<32x256xf32>, vector<16x256xf32> -> vector<16x256xf32>
    %c0_3 = arith.constant 0 : index
    %c0_4 = arith.constant 0 : index
    %3 = vector.load %arg3[%c0_3, %c0_4] : memref<1x256xf32, #tpu.memory_space<vmem>>, vector<1x256xf32>
    %4 = vector.broadcast %3 : vector<1x256xf32> to vector<16x256xf32>
    %5 = arith.addf %2, %4 : vector<16x256xf32>
    %6 = vector.extract_strided_slice %5 {offsets = [0, 0], sizes = [16, 128], strides = [1, 1]} : vector<16x256xf32> to vector<16x128xf32>
    %7 = vector.extract_strided_slice %5 {offsets = [0, 128], sizes = [16, 128], strides = [1, 1]} : vector<16x256xf32> to vector<16x128xf32>
    %8 = arith.negf %7 : vector<16x128xf32>
    %9 = math.exp %8 : vector<16x128xf32>
    %cst_5 = arith.constant 1.000000e+00 : f32
    %10 = vector.broadcast %cst_5 : f32 to vector<16x128xf32>
    %11 = arith.addf %10, %9 : vector<16x128xf32>
    %12 = arith.divf %10, %11 : vector<16x128xf32>
    %13 = arith.mulf %7, %12 : vector<16x128xf32>
    %14 = arith.mulf %6, %13 : vector<16x128xf32>
    %c0_6 = arith.constant 0 : index
    %c0_7 = arith.constant 0 : index
    %15 = vector.load %arg4[%c0_6, %c0_7] : memref<128x32xf32, #tpu.memory_space<vmem>>, vector<128x32xf32>
    %cst_8 = arith.constant dense<0.000000e+00> : vector<16x32xf32>
    %16 = tpu.matmul %14, %15, %cst_8 {dimension_numbers = #tpu.dot_dimension_numbers<[1], [0], [0], [1], [0, 0, 1, 1], [], []>} : vector<16x128xf32>, vector<128x32xf32>, vector<16x32xf32> -> vector<16x32xf32>
    %c0_9 = arith.constant 0 : index
    %c0_10 = arith.constant 0 : index
    %17 = vector.load %arg5[%c0_9, %c0_10] : memref<1x32xf32, #tpu.memory_space<vmem>>, vector<1x32xf32>
    %18 = vector.broadcast %17 : vector<1x32xf32> to vector<16x32xf32>
    %19 = arith.addf %16, %18 : vector<16x32xf32>
    %c0_11 = arith.constant 0 : index
    %c0_12 = arith.constant 0 : index
    %20 = vector.load %arg6[%c0_11, %c0_12] : memref<16x32xf32, #tpu.memory_space<vmem>>, vector<16x32xf32>
    tpu.vector_store %arg6[%c0_11, %c0_12], %19 {strides = array<i32>} : memref<16x32xf32, #tpu.memory_space<vmem>>, vector<16x32xf32>,
    return
  }
  func.func @transform_0(%arg0: i32) -> (i32, i32) {
    %c0_i32 = arith.constant 0 : i32
    %c0_i32_0 = arith.constant 0 : i32
    return %arg0, %c0_i32 : i32, i32
  }
  func.func @transform_1(%arg0: i32) -> (i32, i32) {
    %c0_i32 = arith.constant 0 : i32
    %c0_i32_0 = arith.constant 0 : i32
    %c0_i32_1 = arith.constant 0 : i32
    return %c0_i32, %c0_i32_0 : i32, i32
  }
  func.func @transform_2(%arg0: i32) -> (i32, i32) {
    %c0_i32 = arith.constant 0 : i32
    %c0_i32_0 = arith.constant 0 : i32
    %c0_i32_1 = arith.constant 0 : i32
    return %c0_i32, %c0_i32_0 : i32, i32
  }
  func.func @transform_3(%arg0: i32) -> (i32, i32) {
    %c0_i32 = arith.constant 0 : i32
    %c0_i32_0 = arith.constant 0 : i32
    %c0_i32_1 = arith.constant 0 : i32
    return %c0_i32, %c0_i32_0 : i32, i32
  }
  func.func @transform_4(%arg0: i32) -> (i32, i32) {
    %c0_i32 = arith.constant 0 : i32
    %c0_i32_0 = arith.constant 0 : i32
    %c0_i32_1 = arith.constant 0 : i32
    return %c0_i32, %c0_i32_0 : i32, i32
  }
  func.func @transform_5(%arg0: i32) -> (i32, i32) {
    %c0_i32 = arith.constant 0 : i32
    %c0_i32_0 = arith.constant 0 : i32
    return %arg0, %c0_i32 : i32, i32
  }
}

module attributes {stable_mosaic.version = 11 : i64} {
  func.func @_ffn_swiglu_resident_kernel(%arg0: i32, %arg1: memref<16x32xf32, #tpu.memory_space<vmem>>, %arg2: memref<32x256xf32, #tpu.memory_space<vmem>>, %arg3: memref<1x256xf32, #tpu.memory_space<vmem>>, %arg4: memref<128x32xf32, #tpu.memory_space<vmem>>, %arg5: memref<1x32xf32, #tpu.memory_space<vmem>>, %arg6: memref<16x32xf32, #tpu.memory_space<vmem>>) attributes {dimension_semantics = [#tpu.dimension_semantics<parallel>], iteration_bounds = array<i64: 1>, scalar_prefetch = 0 : i64, scratch_operands = 0 : i64, tpu.core_type = #tpu.core_type<tc>, window_params = [{transform_indices = @transform_0, window_bounds = array<i64: 16, 32>}, {pipeline_mode = #tpu.pipeline_mode<synchronous>, transform_indices = @transform_1, window_bounds = array<i64: 32, 256>}, {pipeline_mode = #tpu.pipeline_mode<synchronous>, transform_indices = @transform_2, window_bounds = array<i64: 1, 256>}, {pipeline_mode = #tpu.pipeline_mode<synchronous>, transform_indices = @transform_3, window_bounds = array<i64: 128, 32>}, {pipeline_mode = #tpu.pipeline_mode<synchronous>, transform_indices = @transform_4, window_bounds = array<i64: 1, 32>}, {transform_indices = @transform_5, window_bounds = array<i64: 16, 32>}]} {
    %c0 = arith.constant 0 : index
    %c0_0 = arith.constant 0 : index
    %0 = vector.load %arg1[%c0, %c0_0] : memref<16x32xf32, #tpu.memory_space<vmem>>, vector<16x32xf32>
    %c0_1 = arith.constant 0 : index
    %c0_2 = arith.constant 0 : index
    %1 = vector.load %arg2[%c0_1, %c0_2] : memref<32x256xf32, #tpu.memory_space<vmem>>, vector<32x256xf32>
    %cst = arith.constant dense<0.000000e+00> : vector<16x256xf32>
    %2 = tpu.matmul %0, %1, %cst {dimension_numbers = #tpu.dot_dimension_numbers<[1], [0], [0], [1], [0, 0, 1, 1], [], []>} : vector<16x32xf32>, vector<32x256xf32>, vector<16x256xf32> -> vector<16x256xf32>
    %c0_3 = arith.constant 0 : index
    %c0_4 = arith.constant 0 : index
    %3 = vector.load %arg3[%c0_3, %c0_4] : memref<1x256xf32, #tpu.memory_space<vmem>>, vector<1x256xf32>
    %4 = vector.broadcast %3 : vector<1x256xf32> to vector<16x256xf32>
    %5 = arith.addf %2, %4 : vector<16x256xf32>
    %6 = vector.extract_strided_slice %5 {offsets = [0, 0], sizes = [16, 128], strides = [1, 1]} : vector<16x256xf32> to vector<16x128xf32>
    %7 = vector.extract_strided_slice %5 {offsets = [0, 128], sizes = [16, 128], strides = [1, 1]} : vector<16x256xf32> to vector<16x128xf32>
    %8 = arith.negf %7 : vector<16x128xf32>
    %9 = math.exp %8 : vector<16x128xf32>
    %cst_5 = arith.constant 1.000000e+00 : f32
    %10 = vector.broadcast %cst_5 : f32 to vector<16x128xf32>
    %11 = arith.addf %10, %9 : vector<16x128xf32>
    %12 = arith.divf %10, %11 : vector<16x128xf32>
    %13 = arith.mulf %7, %12 : vector<16x128xf32>
    %14 = arith.mulf %6, %13 : vector<16x128xf32>
    %c0_6 = arith.constant 0 : index
    %c0_7 = arith.constant 0 : index
    %15 = vector.load %arg4[%c0_6, %c0_7] : memref<128x32xf32, #tpu.memory_space<vmem>>, vector<128x32xf32>
    %cst_8 = arith.constant dense<0.000000e+00> : vector<16x32xf32>
    %16 = tpu.matmul %14, %15, %cst_8 {dimension_numbers = #tpu.dot_dimension_numbers<[1], [0], [0], [1], [0, 0, 1, 1], [], []>} : vector<16x128xf32>, vector<128x32xf32>, vector<16x32xf32> -> vector<16x32xf32>
    %c0_9 = arith.constant 0 : index
    %c0_10 = arith.constant 0 : index
    %17 = vector.load %arg5[%c0_9, %c0_10] : memref<1x32xf32, #tpu.memory_space<vmem>>, vector<1x32xf32>
    %18 = vector.broadcast %17 : vector<1x32xf32> to vector<16x32xf32>
    %19 = arith.addf %16, %18 : vector<16x32xf32>
    %c0_11 = arith.constant 0 : index
    %c0_12 = arith.constant 0 : index
    %20 = vector.load %arg6[%c0_11, %c0_12] : memref<16x32xf32, #tpu.memory_space<vmem>>, vector<16x32xf32>
    tpu.vector_store %arg6[%c0_11, %c0_12], %19 {strides = array<i32>} : memref<16x32xf32, #tpu.memory_space<vmem>>, vector<16x32xf32>,
    return
  }
  func.func @transform_0(%arg0: i32) -> (i32, i32) {
    %c0_i32 = arith.constant 0 : i32
    %c0_i32_0 = arith.constant 0 : i32
    return %arg0, %c0_i32 : i32, i32
  }
  func.func @transform_1(%arg0: i32) -> (i32, i32) {
    %c0_i32 = arith.constant 0 : i32
    %c0_i32_0 = arith.constant 0 : i32
    %c0_i32_1 = arith.constant 0 : i32
    return %c0_i32, %c0_i32_0 : i32, i32
  }
  func.func @transform_2(%arg0: i32) -> (i32, i32) {
    %c0_i32 = arith.constant 0 : i32
    %c0_i32_0 = arith.constant 0 : i32
    %c0_i32_1 = arith.constant 0 : i32
    return %c0_i32, %c0_i32_0 : i32, i32
  }
  func.func @transform_3(%arg0: i32) -> (i32, i32) {
    %c0_i32 = arith.constant 0 : i32
    %c0_i32_0 = arith.constant 0 : i32
    %c0_i32_1 = arith.constant 0 : i32
    return %c0_i32, %c0_i32_0 : i32, i32
  }
  func.func @transform_4(%arg0: i32) -> (i32, i32) {
    %c0_i32 = arith.constant 0 : i32
    %c0_i32_0 = arith.constant 0 : i32
    %c0_i32_1 = arith.constant 0 : i32
    return %c0_i32, %c0_i32_0 : i32, i32
  }
  func.func @transform_5(%arg0: i32) -> (i32, i32) {
    %c0_i32 = arith.constant 0 : i32
    %c0_i32_0 = arith.constant 0 : i32
    return %arg0, %c0_i32 : i32, i32
  }
}

</mosaic_0001>

<llo_original>
// kernel: tpu_custom_call.1
$region0: #{tpu_custom_call.1}
  #allocation0 [shape = 'u32[]', space=smem, size = 0x4, offset = 0x4, fixed_abs, tag = 'smem constant byte address 0x4 - core index']
  #allocation1 [shape = 'u32[144,128]{1,0:T(1,128)}', space=vmem, size = 0x12000, scoped, tag = 'internal scratch']
  %s0 = inlined_call_operand.vmem [shape: f32[16,32], index: 0, kind: input, shape index: {}]
  %s1 = inlined_call_operand.vmem [shape: f32[32,256], index: 1, kind: input, shape index: {}]
  %s2 = inlined_call_operand.vmem [shape: f32[1,256], index: 2, kind: input, shape index: {}]
  %s3 = inlined_call_operand.vmem [shape: f32[128,32], index: 3, kind: input, shape index: {}]
  %s4 = inlined_call_operand.vmem [shape: f32[1,32], index: 4, kind: input, shape index: {}]
  %s5 = inlined_call_operand.hbm [shape: f32[16,32], index: 5, kind: output, shape index: {}]
  %s6 = sld [smem:[#allocation0]]
  $region30: #{tpu_custom_call.1} parent=0
    _
  %s8 = ssub.s32 1, %s6
  %s9 = scalar_select 0, %s8, %s6
  $region1: #{tpu_custom_call.1} parent=0
    #allocation2 [shape = 'u8[8192]{0}', space=vmem, size = 0x2000, scoped, tag = 'output window, operand 0, single buffered']
    #allocation3 [shape = 's32[1]{0}', space=sflag, size = 0x4, scoped, tag = 'scoped memory for tpu_custom_call.1']
    %10 = vsyncpa [#allocation3], 0
    // Predicated region
    $region2: #{tpu_custom_call.1} parent=1 // pred_check
      _
    $region3: #{tpu_custom_call.1} parent=1 // pred_check_branch
      %12 = sbr.rel (0) target = $region5
    $region4: #{tpu_custom_call.1} parent=1 // pred_region
      _
    $region5: #{tpu_custom_call.1} parent=1 // pred_fallthru
      _
    // Predicated region
    $region6: #{tpu_custom_call.1} parent=1 // pred_check
      _
    $region7: #{tpu_custom_call.1} parent=1 // pred_check_branch
      %14 = sbr.rel (0) target = $region9
    $region8: #{tpu_custom_call.1} parent=1 // pred_region
      _
    $region9: #{tpu_custom_call.1} parent=1 // pred_fallthru
      _
    // Predicated region
    $region10: #{tpu_custom_call.1} parent=1 // pred_check
      _
    $region11: #{tpu_custom_call.1} parent=1 // pred_check_branch
      %16 = sbr.rel (0) target = $region13
    $region12: #{tpu_custom_call.1} parent=1 // pred_region
      _
    $region13: #{tpu_custom_call.1} parent=1 // pred_fallthru
      _
    // Predicated region
    $region14: #{tpu_custom_call.1} parent=1 // pred_check
      _
    $region15: #{tpu_custom_call.1} parent=1 // pred_check_branch
      %18 = sbr.rel (0) target = $region17
    $region16: #{tpu_custom_call.1} parent=1 // pred_region
      _
    $region17: #{tpu_custom_call.1} parent=1 // pred_fallthru
      _
    // Predicated region
    $region18: #{tpu_custom_call.1} parent=1 // pred_check
      _
    $region19: #{tpu_custom_call.1} parent=1 // pred_check_branch
      %20 = sbr.rel (0) target = $region21
    $region20: #{tpu_custom_call.1} parent=1 // pred_region
      _
    $region21: #{tpu_custom_call.1} parent=1 // pred_fallthru
      _
    %v21 = vld [vmem:[%s0] sm:$0xff]
    %v22 = vld [vmem:[%s0 + $0x8] sm:$0xff]
    %v23 = vld [vmem:[%s1] sm:$0xff]
    %v24 = vld [vmem:[%s1 + $0x8] sm:$0xff]
    %v25 = vld [vmem:[%s1 + $0x10] sm:$0xff]
    %v26 = vld [vmem:[%s1 + $0x18] sm:$0xff]
    %v27 = vld [vmem:[%s1 + $0x20] sm:$0xff]
    %v28 = vld [vmem:[%s1 + $0x28] sm:$0xff]
    %v29 = vld [vmem:[%s1 + $0x30] sm:$0xff]
    %v30 = vld [vmem:[%s1 + $0x38] sm:$0xff]
    %v31 = vld [vmem:[%s2] sm:$0x3]
    %v33 = vlaneseq
    %v34 = vshrl.u32 %v33, 7
    %v35 = vsub.s32 0, %v34
    %v36 = vrot.slane %v31, %v35
    %v37 = vlaneseq
    %v38 = vshrl.u32 %v37, 7
    %v39 = vsub.s32 1, %v38
    %v40 = vrot.slane %v31, %v39
    %vm43 = vcmask 261120
    %v45 = vsel %vm43, %v21, 0
    %v48 = vsel %vm43, %v22, 0
    %50 = vmatprep.subr.mxu0 %v24
    %51 = vmatpush1.msra.mxu0 %v23
    %52 = vmatprep.subr.mxu0 %v26
    %53 = vmatpush1.msra.mxu0 %v25
    %54 = vmatprep.subr.mxu0 %v28
    %55 = vmatpush1.msra.mxu0 %v27
    %56 = vmatprep.subr.mxu0 %v30
    %57 = vmatpush1.msra.mxu0 %v29
    %58 = vmatprep.subr.mxu0 0.0
    %59 = vmatpush1.msra.mxu0 0.0
    %60 = vmatprep.subr.mxu0 0.0
    %61 = vmatpush1.msra.mxu0 0.0
    %62 = vmatprep.subr.mxu0 0.0
    %63 = vmatpush1.msra.mxu0 0.0
    %64 = vmatprep.subr.mxu0 0.0
    %65 = vmatpush1.msra.mxu0 0.0
    %66 = vmatprep.subr.mxu0 0.0
    %67 = vmatpush1.msra.mxu0 0.0
    %68 = vmatprep.subr.mxu0 0.0
    %69 = vmatpush1.msra.mxu0 0.0
    %70 = vmatprep.subr.mxu0 0.0
    %71 = vmatpush1.msra.mxu0 0.0
    %72 = vmatprep.subr.mxu0 0.0
    %73 = vmatpush1.msra.mxu0 0.0
    %74 = vmatprep.subr.mxu0 0.0
    %75 = vmatpush1.msra.mxu0 0.0
    %76 = vmatprep.subr.mxu0 0.0
    %77 = vmatpush1.msra.mxu0 0.0
    %78 = vmatprep.subr.mxu0 0.0
    %79 = vmatpush1.msra.mxu0 0.0
    %80 = vmatprep.subr.mxu0 0.0
    %81 = vmatpush1.msra.mxu0 0.0
    %82 = vmatprep.subr.mxu0 0.0
    %83 = vmatpush1.msra.mxu0 0.0
    %84 = vmatprep.subr.mxu0 0.0
    %85 = vmatpush1.msra.mxu0 0.0
    %86 = vmatprep.subr.mxu0 0.0
    %87 = vmatpush1.msra.mxu0 0.0
    %88 = vmatprep.subr.mxu0 0.0
    %89 = vmatpush1.msra.mxu0 0.0
    %90 = vmatprep.subr.mxu0 0.0
    %91 = vmatpush1.msra.mxu0 0.0
    %92 = vmatprep.subr.mxu0 0.0
    %93 = vmatpush1.msra.mxu0 0.0
    %94 = vmatprep.subr.mxu0 0.0
    %95 = vmatpush1.msra.mxu0 0.0
    %96 = vmatprep.subr.mxu0 0.0
    %97 = vmatpush1.msra.mxu0 0.0
    %98 = vmatprep.subr.mxu0 0.0
    %99 = vmatpush1.msra.mxu0 0.0
    %100 = vmatprep.subr.mxu0 0.0
    %101 = vmatpush1.msra.mxu0 0.0
    %102 = vmatprep.subr.mxu0 0.0
    %103 = vmatpush1.msra.mxu0 0.0
    %104 = vmatprep.subr.mxu0 0.0
    %105 = vmatpush1.msra.mxu0 0.0
    %106 = vmatprep.subr.mxu0 0.0
    %107 = vmatpush1.msra.mxu0 0.0
    %108 = vmatprep.subr.mxu0 0.0
    %109 = vmatpush1.msra.mxu0 0.0
    %110 = vmatprep.subr.mxu0 0.0
    %111 = vmatpush1.msra.mxu0 0.0
    %112 = vmatprep.subr.mxu0 0.0
    %113 = vmatpush1.msra.mxu0 0.0
    %114 = vmatprep.mubr.f32.mxu0 0.0
    %115 = vmatmul.mubr.f32.gmra.mrb[0].mxu0 %v45
    %v116 = vpop.f32.mrb[0].mxu0
    %v117 = vadd.f32 %v36, %v116
    %v118 = vpop.f32.mrb[0].mxu0
    %v119 = vadd.f32 %v40, %v118
    %120 = vmatprep.mubr.f32.mxu0 0.0
    %121 = vmatmul.mubr.f32.gmra.mrb[0].mxu0 %v48
    %v122 = vpop.f32.mrb[0].mxu0
    %v123 = vadd.f32 %v36, %v122
    %v124 = vpop.f32.mrb[0].mxu0
    %v125 = vadd.f32 %v40, %v124
    %126 = vdwg.mxu0
    %v127 = vxor.u32 %v119, 2147483648
    %v128 = vxor.u32 %v125, 2147483648
    %v129 = vmul.f32 %v127, 1.442695
    %v130 = vpow.pop %v129
    %v131 = vmul.f32 %v128, 1.442695
    %v132 = vpow.pop %v131
    %v133 = vadd.f32 %v130, 1.0
    %v134 = vadd.f32 %v132, 1.0
    %v135 = vrcp.pop %v133
    %v136 = vmul.f32 1.0, %v135
    %v137 = vrcp.pop %v134
    %v138 = vmul.f32 1.0, %v137
    %v139 = vmul.f32 %v119, %v136
    %v140 = vmul.f32 %v125, %v138
    %v141 = vmul.f32 %v117, %v139
    %v142 = vmul.f32 %v123, %v140
    %v143 = vld [vmem:[%s3] sm:$0xff]
    %v144 = vld [vmem:[%s3 + $0x8] sm:$0xff]
    %v145 = vld [vmem:[%s3 + $0x10] sm:$0xff]
    %v146 = vld [vmem:[%s3 + $0x18] sm:$0xff]
    %v147 = vld [vmem:[%s3 + $0x20] sm:$0xff]
    %v148 = vld [vmem:[%s3 + $0x28] sm:$0xff]
    %v149 = vld [vmem:[%s3 + $0x30] sm:$0xff]
    %v150 = vld [vmem:[%s3 + $0x38] sm:$0xff]
    %v151 = vld [vmem:[%s3 + $0x40] sm:$0xff]
    %v152 = vld [vmem:[%s3 + $0x48] sm:$0xff]
    %v153 = vld [vmem:[%s3 + $0x50] sm:$0xff]
    %v154 = vld [vmem:[%s3 + $0x58] sm:$0xff]
    %v155 = vld [vmem:[%s3 + $0x60] sm:$0xff]
    %v156 = vld [vmem:[%s3 + $0x68] sm:$0xff]
    %v157 = vld [vmem:[%s3 + $0x70] sm:$0xff]
    %v158 = vld [vmem:[%s3 + $0x78] sm:$0xff]
    %v159 = vld [vmem:[%s4] sm:$0x1]
    %v161 = vlaneseq
    %v162 = vshrl.u32 %v161, 7
    %v163 = vsub.s32 0, %v162
    %v164 = vrot.slane %v159, %v163
    %166 = vmatprep.subr.mxu0 0.0
    %167 = vmatpush1.msra.mxu0 %v143
    %168 = vmatprep.subr.mxu0 0.0
    %169 = vmatpush1.msra.mxu0 %v144
    %170 = vmatprep.subr.mxu0 0.0
    %171 = vmatpush1.msra.mxu0 %v145
    %172 = vmatprep.subr.mxu0 0.0
    %173 = vmatpush1.msra.mxu0 %v146
    %174 = vmatprep.subr.mxu0 0.0
    %175 = vmatpush1.msra.mxu0 %v147
    %176 = vmatprep.subr.mxu0 0.0
    %177 = vmatpush1.msra.mxu0 %v148
    %178 = vmatprep.subr.mxu0 0.0
    %179 = vmatpush1.msra.mxu0 %v149
    %180 = vmatprep.subr.mxu0 0.0
    %181 = vmatpush1.msra.mxu0 %v150
    %182 = vmatprep.subr.mxu0 0.0
    %183 = vmatpush1.msra.mxu0 %v151
    %184 = vmatprep.subr.mxu0 0.0
    %185 = vmatpush1.msra.mxu0 %v152
    %186 = vmatprep.subr.mxu0 0.0
    %187 = vmatpush1.msra.mxu0 %v153
    %188 = vmatprep.subr.mxu0 0.0
    %189 = vmatpush1.msra.mxu0 %v154
    %190 = vmatprep.subr.mxu0 0.0
    %191 = vmatpush1.msra.mxu0 %v155
    %192 = vmatprep.subr.mxu0 0.0
    %193 = vmatpush1.msra.mxu0 %v156
    %194 = vmatprep.subr.mxu0 0.0
    %195 = vmatpush1.msra.mxu0 %v157
    %196 = vmatprep.subr.mxu0 0.0
    %197 = vmatpush1.msra.mxu0 %v158
    %198 = vmatprep.subr.mxu0 0.0
    %199 = vmatpush1.msra.mxu0 0.0
    %200 = vmatprep.subr.mxu0 0.0
    %201 = vmatpush1.msra.mxu0 0.0
    %202 = vmatprep.subr.mxu0 0.0
    %203 = vmatpush1.msra.mxu0 0.0
    %204 = vmatprep.subr.mxu0 0.0
    %205 = vmatpush1.msra.mxu0 0.0
    %206 = vmatprep.subr.mxu0 0.0
    %207 = vmatpush1.msra.mxu0 0.0
    %208 = vmatprep.subr.mxu0 0.0
    %209 = vmatpush1.msra.mxu0 0.0
    %210 = vmatprep.subr.mxu0 0.0
    %211 = vmatpush1.msra.mxu0 0.0
    %212 = vmatprep.subr.mxu0 0.0
    %213 = vmatpush1.msra.mxu0 0.0
    %214 = vmatprep.subr.mxu0 0.0
    %215 = vmatpush1.msra.mxu0 0.0
    %216 = vmatprep.subr.mxu0 0.0
    %217 = vmatpush1.msra.mxu0 0.0
    %218 = vmatprep.subr.mxu0 0.0
    %219 = vmatpush1.msra.mxu0 0.0
    %220 = vmatprep.subr.mxu0 0.0
    %221 = vmatpush1.msra.mxu0 0.0
    %222 = vmatprep.subr.mxu0 0.0
    %223 = vmatpush1.msra.mxu0 0.0
    %224 = vmatprep.subr.mxu0 0.0
    %225 = vmatpush1.msra.mxu0 0.0
    %226 = vmatprep.subr.mxu0 0.0
    %227 = vmatpush1.msra.mxu0 0.0
    %228 = vmatprep.subr.mxu0 0.0
    %229 = vmatpush1.msra.mxu0 0.0
    %230 = vmatprep.mubr.f32.mxu0 0.0
    %231 = vmatmul.mubr.f32.gmra.mrb[0].mxu0 %v141
    %v232 = vpop.f32.mrb[0].mxu0
    %v233 = vadd.f32 %v164, %v232
    %v234 = vpop.f32.mrb[0].mxu0
    %235 = vmatprep.mubr.f32.mxu0 0.0
    %236 = vmatmul.mubr.f32.gmra.mrb[0].mxu0 %v142
    %v237 = vpop.f32.mrb[0].mxu0
    %v238 = vadd.f32 %v164, %v237
    %v239 = vpop.f32.mrb[0].mxu0
    %240 = vdwg.mxu0
    %241 = vst.msk [vmem:[#allocation2] sm:$0xff] %vm43, %v233
    %242 = vst.msk [vmem:[#allocation2 + $0x8] sm:$0xff] %vm43, %v238
    // Predicated region
    $region22: #{tpu_custom_call.1} parent=1 // pred_check
      _
    $region23: #{tpu_custom_call.1} parent=1 // pred_check_branch
      %244 = sbr.rel (0) target = $region25
    $region24: #{tpu_custom_call.1} parent=1 // pred_region
      %s246 = ssub.s32 256, 256
      %247 = vsyncadd [#allocation3], %s246
      %s248 = sshll.u32 [#allocation2], 4
      %s249 = int_to_ptr.vmem [resolvable:$true] %s248
      %254 = dma.vmem_to_hbm [thread:$0]  %s249, 256, %s5, [#allocation3], 128, 128, 8
    $region25: #{tpu_custom_call.1} parent=1 // pred_fallthru
      _
    // Predicated region
    $region26: #{tpu_custom_call.1} parent=1 // pred_check
      _
    $region27: #{tpu_custom_call.1} parent=1 // pred_check_branch
      %256 = sbr.rel (0) target = $region29
    $region28: #{tpu_custom_call.1} parent=1 // pred_region
      %257 = dma.done [#allocation3], 256
    $region29: #{tpu_custom_call.1} parent=1 // pred_fallthru
      _
    %258 = vsyncpa [#allocation3], 1

// kernel: tpu_custom_call.1
$region0: #{tpu_custom_call.1}
  #allocation0 [shape = 'u32[]', space=smem, size = 0x4, offset = 0x4, fixed_abs, tag = 'smem constant byte address 0x4 - core index']
  #allocation1 [shape = 'u32[144,128]{1,0:T(1,128)}', space=vmem, size = 0x12000, scoped, tag = 'internal scratch']
  %s0 = inlined_call_operand.vmem [shape: f32[16,32], index: 0, kind: input, shape index: {}]
  %s1 = inlined_call_operand.vmem [shape: f32[32,256], index: 1, kind: input, shape index: {}]
  %s2 = inlined_call_operand.vmem [shape: f32[1,256], index: 2, kind: input, shape index: {}]
  %s3 = inlined_call_operand.vmem [shape: f32[128,32], index: 3, kind: input, shape index: {}]
  %s4 = inlined_call_operand.vmem [shape: f32[1,32], index: 4, kind: input, shape index: {}]
  %s5 = inlined_call_operand.hbm [shape: f32[16,32], index: 5, kind: output, shape index: {}]
  %s6 = sld [smem:[#allocation0]]
  $region30: #{tpu_custom_call.1} parent=0
    _
  %s8 = ssub.s32 1, %s6
  %s9 = scalar_select 0, %s8, %s6
  $region1: #{tpu_custom_call.1} parent=0
    #allocation2 [shape = 'u8[8192]{0}', space=vmem, size = 0x2000, scoped, tag = 'output window, operand 0, single buffered']
    #allocation3 [shape = 's32[1]{0}', space=sflag, size = 0x4, scoped, tag = 'scoped memory for tpu_custom_call.1']
    %10 = vsyncpa [#allocation3], 0
    // Predicated region
    $region2: #{tpu_custom_call.1} parent=1 // pred_check
      _
    $region3: #{tpu_custom_call.1} parent=1 // pred_check_branch
      %12 = sbr.rel (0) target = $region5
    $region4: #{tpu_custom_call.1} parent=1 // pred_region
      _
    $region5: #{tpu_custom_call.1} parent=1 // pred_fallthru
      _
    // Predicated region
    $region6: #{tpu_custom_call.1} parent=1 // pred_check
      _
    $region7: #{tpu_custom_call.1} parent=1 // pred_check_branch
      %14 = sbr.rel (0) target = $region9
    $region8: #{tpu_custom_call.1} parent=1 // pred_region
      _
    $region9: #{tpu_custom_call.1} parent=1 // pred_fallthru
      _
    // Predicated region
    $region10: #{tpu_custom_call.1} parent=1 // pred_check
      _
    $region11: #{tpu_custom_call.1} parent=1 // pred_check_branch
      %16 = sbr.rel (0) target = $region13
    $region12: #{tpu_custom_call.1} parent=1 // pred_region
      _
    $region13: #{tpu_custom_call.1} parent=1 // pred_fallthru
      _
    // Predicated region
    $region14: #{tpu_custom_call.1} parent=1 // pred_check
      _
    $region15: #{tpu_custom_call.1} parent=1 // pred_check_branch
      %18 = sbr.rel (0) target = $region17
    $region16: #{tpu_custom_call.1} parent=1 // pred_region
      _
    $region17: #{tpu_custom_call.1} parent=1 // pred_fallthru
      _
    // Predicated region
    $region18: #{tpu_custom_call.1} parent=1 // pred_check
      _
    $region19: #{tpu_custom_call.1} parent=1 // pred_check_branch
      %20 = sbr.rel (0) target = $region21
    $region20: #{tpu_custom_call.1} parent=1 // pred_region
      _
    $region21: #{tpu_custom_call.1} parent=1 // pred_fallthru
      _
    %v21 = vld [vmem:[%s0] sm:$0xff]
    %v22 = vld [vmem:[%s0 + $0x8] sm:$0xff]
    %v23 = vld [vmem:[%s1] sm:$0xff]
    %v24 = vld [vmem:[%s1 + $0x8] sm:$0xff]
    %v25 = vld [vmem:[%s1 + $0x10] sm:$0xff]
    %v26 = vld [vmem:[%s1 + $0x18] sm:$0xff]
    %v27 = vld [vmem:[%s1 + $0x20] sm:$0xff]
    %v28 = vld [vmem:[%s1 + $0x28] sm:$0xff]
    %v29 = vld [vmem:[%s1 + $0x30] sm:$0xff]
    %v30 = vld [vmem:[%s1 + $0x38] sm:$0xff]
    %v31 = vld [vmem:[%s2] sm:$0x3]
    %v33 = vlaneseq
    %v34 = vshrl.u32 %v33, 7
    %v35 = vsub.s32 0, %v34
    %v36 = vrot.slane %v31, %v35
    %v37 = vlaneseq
    %v38 = vshrl.u32 %v37, 7
    %v39 = vsub.s32 1, %v38
    %v40 = vrot.slane %v31, %v39
    %vm43 = vcmask 261120
    %v45 = vsel %vm43, %v21, 0
    %v48 = vsel %vm43, %v22, 0
    %50 = vmatprep.subr.mxu0 %v24
    %51 = vmatpush1.msra.mxu0 %v23
    %52 = vmatprep.subr.mxu0 %v26
    %53 = vmatpush1.msra.mxu0 %v25
    %54 = vmatprep.subr.mxu0 %v28
    %55 = vmatpush1.msra.mxu0 %v27
    %56 = vmatprep.subr.mxu0 %v30
    %57 = vmatpush1.msra.mxu0 %v29
    %58 = vmatprep.subr.mxu0 0.0
    %59 = vmatpush1.msra.mxu0 0.0
    %60 = vmatprep.subr.mxu0 0.0
    %61 = vmatpush1.msra.mxu0 0.0
    %62 = vmatprep.subr.mxu0 0.0
    %63 = vmatpush1.msra.mxu0 0.0
    %64 = vmatprep.subr.mxu0 0.0
    %65 = vmatpush1.msra.mxu0 0.0
    %66 = vmatprep.subr.mxu0 0.0
    %67 = vmatpush1.msra.mxu0 0.0
    %68 = vmatprep.subr.mxu0 0.0
    %69 = vmatpush1.msra.mxu0 0.0
    %70 = vmatprep.subr.mxu0 0.0
    %71 = vmatpush1.msra.mxu0 0.0
    %72 = vmatprep.subr.mxu0 0.0
    %73 = vmatpush1.msra.mxu0 0.0
    %74 = vmatprep.subr.mxu0 0.0
    %75 = vmatpush1.msra.mxu0 0.0
    %76 = vmatprep.subr.mxu0 0.0
    %77 = vmatpush1.msra.mxu0 0.0
    %78 = vmatprep.subr.mxu0 0.0
    %79 = vmatpush1.msra.mxu0 0.0
    %80 = vmatprep.subr.mxu0 0.0
    %81 = vmatpush1.msra.mxu0 0.0
    %82 = vmatprep.subr.mxu0 0.0
    %83 = vmatpush1.msra.mxu0 0.0
    %84 = vmatprep.subr.mxu0 0.0
    %85 = vmatpush1.msra.mxu0 0.0
    %86 = vmatprep.subr.mxu0 0.0
    %87 = vmatpush1.msra.mxu0 0.0
    %88 = vmatprep.subr.mxu0 0.0
    %89 = vmatpush1.msra.mxu0 0.0
    %90 = vmatprep.subr.mxu0 0.0
    %91 = vmatpush1.msra.mxu0 0.0
    %92 = vmatprep.subr.mxu0 0.0
    %93 = vmatpush1.msra.mxu0 0.0
    %94 = vmatprep.subr.mxu0 0.0
    %95 = vmatpush1.msra.mxu0 0.0
    %96 = vmatprep.subr.mxu0 0.0
    %97 = vmatpush1.msra.mxu0 0.0
    %98 = vmatprep.subr.mxu0 0.0
    %99 = vmatpush1.msra.mxu0 0.0
    %100 = vmatprep.subr.mxu0 0.0
    %101 = vmatpush1.msra.mxu0 0.0
    %102 = vmatprep.subr.mxu0 0.0
    %103 = vmatpush1.msra.mxu0 0.0
    %104 = vmatprep.subr.mxu0 0.0
    %105 = vmatpush1.msra.mxu0 0.0
    %106 = vmatprep.subr.mxu0 0.0
    %107 = vmatpush1.msra.mxu0 0.0
    %108 = vmatprep.subr.mxu0 0.0
    %109 = vmatpush1.msra.mxu0 0.0
    %110 = vmatprep.subr.mxu0 0.0
    %111 = vmatpush1.msra.mxu0 0.0
    %112 = vmatprep.subr.mxu0 0.0
    %113 = vmatpush1.msra.mxu0 0.0
    %114 = vmatprep.mubr.f32.mxu0 0.0
    %115 = vmatmul.mubr.f32.gmra.mrb[0].mxu0 %v45
    %v116 = vpop.f32.mrb[0].mxu0
    %v117 = vadd.f32 %v36, %v116
    %v118 = vpop.f32.mrb[0].mxu0
    %v119 = vadd.f32 %v40, %v118
    %120 = vmatprep.mubr.f32.mxu0 0.0
    %121 = vmatmul.mubr.f32.gmra.mrb[0].mxu0 %v48
    %v122 = vpop.f32.mrb[0].mxu0
    %v123 = vadd.f32 %v36, %v122
    %v124 = vpop.f32.mrb[0].mxu0
    %v125 = vadd.f32 %v40, %v124
    %126 = vdwg.mxu0
    %v127 = vxor.u32 %v119, 2147483648
    %v128 = vxor.u32 %v125, 2147483648
    %v129 = vmul.f32 %v127, 1.442695
    %v130 = vpow.pop %v129
    %v131 = vmul.f32 %v128, 1.442695
    %v132 = vpow.pop %v131
    %v133 = vadd.f32 %v130, 1.0
    %v134 = vadd.f32 %v132, 1.0
    %v135 = vrcp.pop %v133
    %v136 = vmul.f32 1.0, %v135
    %v137 = vrcp.pop %v134
    %v138 = vmul.f32 1.0, %v137
    %v139 = vmul.f32 %v119, %v136
    %v140 = vmul.f32 %v125, %v138
    %v141 = vmul.f32 %v117, %v139
    %v142 = vmul.f32 %v123, %v140
    %v143 = vld [vmem:[%s3] sm:$0xff]
    %v144 = vld [vmem:[%s3 + $0x8] sm:$0xff]
    %v145 = vld [vmem:[%s3 + $0x10] sm:$0xff]
    %v146 = vld [vmem:[%s3 + $0x18] sm:$0xff]
    %v147 = vld [vmem:[%s3 + $0x20] sm:$0xff]
    %v148 = vld [vmem:[%s3 + $0x28] sm:$0xff]
    %v149 = vld [vmem:[%s3 + $0x30] sm:$0xff]
    %v150 = vld [vmem:[%s3 + $0x38] sm:$0xff]
    %v151 = vld [vmem:[%s3 + $0x40] sm:$0xff]
    %v152 = vld [vmem:[%s3 + $0x48] sm:$0xff]
    %v153 = vld [vmem:[%s3 + $0x50] sm:$0xff]
    %v154 = vld [vmem:[%s3 + $0x58] sm:$0xff]
    %v155 = vld [vmem:[%s3 + $0x60] sm:$0xff]
    %v156 = vld [vmem:[%s3 + $0x68] sm:$0xff]
    %v157 = vld [vmem:[%s3 + $0x70] sm:$0xff]
    %v158 = vld [vmem:[%s3 + $0x78] sm:$0xff]
    %v159 = vld [vmem:[%s4] sm:$0x1]
    %v161 = vlaneseq
    %v162 = vshrl.u32 %v161, 7
    %v163 = vsub.s32 0, %v162
    %v164 = vrot.slane %v159, %v163
    %166 = vmatprep.subr.mxu0 0.0
    %167 = vmatpush1.msra.mxu0 %v143
    %168 = vmatprep.subr.mxu0 0.0
    %169 = vmatpush1.msra.mxu0 %v144
    %170 = vmatprep.subr.mxu0 0.0
    %171 = vmatpush1.msra.mxu0 %v145
    %172 = vmatprep.subr.mxu0 0.0
    %173 = vmatpush1.msra.mxu0 %v146
    %174 = vmatprep.subr.mxu0 0.0
    %175 = vmatpush1.msra.mxu0 %v147
    %176 = vmatprep.subr.mxu0 0.0
    %177 = vmatpush1.msra.mxu0 %v148
    %178 = vmatprep.subr.mxu0 0.0
    %179 = vmatpush1.msra.mxu0 %v149
    %180 = vmatprep.subr.mxu0 0.0
    %181 = vmatpush1.msra.mxu0 %v150
    %182 = vmatprep.subr.mxu0 0.0
    %183 = vmatpush1.msra.mxu0 %v151
    %184 = vmatprep.subr.mxu0 0.0
    %185 = vmatpush1.msra.mxu0 %v152
    %186 = vmatprep.subr.mxu0 0.0
    %187 = vmatpush1.msra.mxu0 %v153
    %188 = vmatprep.subr.mxu0 0.0
    %189 = vmatpush1.msra.mxu0 %v154
    %190 = vmatprep.subr.mxu0 0.0
    %191 = vmatpush1.msra.mxu0 %v155
    %192 = vmatprep.subr.mxu0 0.0
    %193 = vmatpush1.msra.mxu0 %v156
    %194 = vmatprep.subr.mxu0 0.0
    %195 = vmatpush1.msra.mxu0 %v157
    %196 = vmatprep.subr.mxu0 0.0
    %197 = vmatpush1.msra.mxu0 %v158
    %198 = vmatprep.subr.mxu0 0.0
    %199 = vmatpush1.msra.mxu0 0.0
    %200 = vmatprep.subr.mxu0 0.0
    %201 = vmatpush1.msra.mxu0 0.0
    %202 = vmatprep.subr.mxu0 0.0
    %203 = vmatpush1.msra.mxu0 0.0
    %204 = vmatprep.subr.mxu0 0.0
    %205 = vmatpush1.msra.mxu0 0.0
    %206 = vmatprep.subr.mxu0 0.0
    %207 = vmatpush1.msra.mxu0 0.0
    %208 = vmatprep.subr.mxu0 0.0
    %209 = vmatpush1.msra.mxu0 0.0
    %210 = vmatprep.subr.mxu0 0.0
    %211 = vmatpush1.msra.mxu0 0.0
    %212 = vmatprep.subr.mxu0 0.0
    %213 = vmatpush1.msra.mxu0 0.0
    %214 = vmatprep.subr.mxu0 0.0
    %215 = vmatpush1.msra.mxu0 0.0
    %216 = vmatprep.subr.mxu0 0.0
    %217 = vmatpush1.msra.mxu0 0.0
    %218 = vmatprep.subr.mxu0 0.0
    %219 = vmatpush1.msra.mxu0 0.0
    %220 = vmatprep.subr.mxu0 0.0
    %221 = vmatpush1.msra.mxu0 0.0
    %222 = vmatprep.subr.mxu0 0.0
    %223 = vmatpush1.msra.mxu0 0.0
    %224 = vmatprep.subr.mxu0 0.0
    %225 = vmatpush1.msra.mxu0 0.0
    %226 = vmatprep.subr.mxu0 0.0
    %227 = vmatpush1.msra.mxu0 0.0
    %228 = vmatprep.subr.mxu0 0.0
    %229 = vmatpush1.msra.mxu0 0.0
    %230 = vmatprep.mubr.f32.mxu0 0.0
    %231 = vmatmul.mubr.f32.gmra.mrb[0].mxu0 %v141
    %v232 = vpop.f32.mrb[0].mxu0
    %v233 = vadd.f32 %v164, %v232
    %v234 = vpop.f32.mrb[0].mxu0
    %235 = vmatprep.mubr.f32.mxu0 0.0
    %236 = vmatmul.mubr.f32.gmra.mrb[0].mxu0 %v142
    %v237 = vpop.f32.mrb[0].mxu0
    %v238 = vadd.f32 %v164, %v237
    %v239 = vpop.f32.mrb[0].mxu0
    %240 = vdwg.mxu0
    %241 = vst.msk [vmem:[#allocation2] sm:$0xff] %vm43, %v233
    %242 = vst.msk [vmem:[#allocation2 + $0x8] sm:$0xff] %vm43, %v238
    // Predicated region
    $region22: #{tpu_custom_call.1} parent=1 // pred_check
      _
    $region23: #{tpu_custom_call.1} parent=1 // pred_check_branch
      %244 = sbr.rel (0) target = $region25
    $region24: #{tpu_custom_call.1} parent=1 // pred_region
      %s246 = ssub.s32 256, 256
      %247 = vsyncadd [#allocation3], %s246
      %s248 = sshll.u32 [#allocation2], 4
      %s249 = int_to_ptr.vmem [resolvable:$true] %s248
      %254 = dma.vmem_to_hbm [thread:$0]  %s249, 256, %s5, [#allocation3], 128, 128, 8
    $region25: #{tpu_custom_call.1} parent=1 // pred_fallthru
      _
    // Predicated region
    $region26: #{tpu_custom_call.1} parent=1 // pred_check
      _
    $region27: #{tpu_custom_call.1} parent=1 // pred_check_branch
      %256 = sbr.rel (0) target = $region29
    $region28: #{tpu_custom_call.1} parent=1 // pred_region
      %257 = dma.done [#allocation3], 256
    $region29: #{tpu_custom_call.1} parent=1 // pred_fallthru
      _
    %258 = vsyncpa [#allocation3], 1

</llo_original>
